<compile_context>
chip_gen: v7x
topology: tpu7x:2x2x1
jax: 0.10.0
libtpu: 0.0.40
codegen_flags: <defaults>
</compile_context>

<pallas_src>
import functools

import jax
import jax.numpy as jnp
from jax.experimental import pallas as pl
from jax.experimental.pallas import tpu as pltpu


def _round_up(n, m):
    return ((n + m - 1) // m) * m


def mlp_kernel(x_ref, w1_ref, b1_ref, w2_ref, b2_ref, w3_ref, b3_ref, o_ref):
    # fc1 + ReLU: x read as f32 from HBM, cast to bf16 at first use (no
    # wrapper-side materialized copy). f32 MXU accumulation, f32 epilogue.
    x = x_ref[...].astype(jnp.bfloat16)
    h1 = jnp.dot(x, w1_ref[...], preferred_element_type=jnp.float32)
    h1 = jnp.maximum(h1 + b1_ref[...], 0.0)
    # fc2 + ReLU
    h2 = jnp.dot(h1.astype(jnp.bfloat16), w2_ref[...],
                 preferred_element_type=jnp.float32)
    h2 = jnp.maximum(h2 + b2_ref[...], 0.0)
    # fc3 + sigmoid(z) = 1 / (1 + exp(-z)); exp + reciprocal run on the EUP.
    z = jnp.dot(h2.astype(jnp.bfloat16), w3_ref[...],
                preferred_element_type=jnp.float32)
    z = z + b3_ref[...]
    o_ref[...] = pl.reciprocal(1.0 + jnp.exp(-z), approx=True).astype(o_ref.dtype)


def pack_params(w1, b1, w2, b2, w3, b3):
    """One-time parameter prep: bf16 MXU operands, f32 (1, out) biases.

    Done once outside the per-call forward so no cast/pad work re-runs per call.
    Weights are stored (in, out) so the kernel computes x @ W.
    """
    bf16, f32 = jnp.bfloat16, jnp.float32
    return (w1.astype(bf16), jnp.reshape(b1, (1, -1)).astype(f32),
            w2.astype(bf16), jnp.reshape(b2, (1, -1)).astype(f32),
            w3.astype(bf16), jnp.reshape(b3, (1, -1)).astype(f32))


@functools.partial(jax.jit, static_argnames=("block_b",))
def multi_label_classifier(x, params, *, block_b=2048):
    """x: (B, input_size) f32. params: output of pack_params()."""
    w1, b1, w2, b2, w3, b3 = params
    B, K = x.shape
    H1 = w1.shape[1]
    H2 = w2.shape[1]
    N = w3.shape[1]

    # Batch tile: multiple of 8 sublanes, sized so the grid has >= 2 steps
    # whenever possible (lets the "parallel" batch axis shard across v7x's two
    # TensorCores), capped by block_b to bound VMEM. Ragged last tiles are
    # handled by Pallas (OOB output rows are discarded; rows are independent).
    tb = max(8, min(block_b, _round_up(pl.cdiv(B, 2), 8)))
    grid = (pl.cdiv(B, tb),)

    # Advisory cost for XLA's scheduler (real, unpadded traffic).
    flops = 2 * B * (K * H1 + H1 * H2 + H2 * N)
    bytes_accessed = (B * K * 4                            # x read (f32)
                      + (K * H1 + H1 * H2 + H2 * N) * 2    # bf16 weights
                      + (H1 + H2 + N) * 4                  # f32 biases
                      + B * N * 4)                         # f32 output write
    cost = pl.CostEstimate(flops=flops,
                           transcendentals=2 * B * N,      # exp + reciprocal
                           bytes_accessed=bytes_accessed)

    # VMEM: double-buffered x/out tiles + f32 intermediates + (small) weights.
    vmem_est = (2 * tb * K * 4 + 2 * tb * N * 4 + tb * (H1 + H2) * 4
                + 2 * ((K * H1 + H1 * H2 + H2 * N) * 2 + (H1 + H2 + N) * 4))
    cp_kwargs = dict(dimension_semantics=("parallel",))
    if vmem_est > 12 * 1024 * 1024:   # only bump past v5e's 16 MiB default
        cp_kwargs["vmem_limit_bytes"] = min(2 * vmem_est, 64 * 1024 * 1024)

    return pl.pallas_call(
        mlp_kernel,
        out_shape=jax.ShapeDtypeStruct((B, N), jnp.float32),
        grid=grid,
        in_specs=[
            pl.BlockSpec((tb, K), lambda i: (i, 0)),   # x: streamed per tile
            pl.BlockSpec((K, H1), lambda i: (0, 0)),   # weights/biases return a
            pl.BlockSpec((1, H1), lambda i: (0, 0)),   #   constant block index ->
            pl.BlockSpec((H1, H2), lambda i: (0, 0)),  #   DMA'd once, VMEM-resident
            pl.BlockSpec((1, H2), lambda i: (0, 0)),   #   across all grid steps.
            pl.BlockSpec((H2, N), lambda i: (0, 0)),
            pl.BlockSpec((1, N), lambda i: (0, 0)),
        ],
        out_specs=pl.BlockSpec((tb, N), lambda i: (i, 0)),
        compiler_params=pltpu.CompilerParams(**cp_kwargs),
        cost_estimate=cost,
    )(x, w1, b1, w2, b2, w3, b3)


def init_linear(key, in_features, out_features):
    """PyTorch-style uniform(-1/sqrt(in), 1/sqrt(in)) init, deterministic."""
    kw, kb = jax.random.split(key)
    bound = 1.0 / jnp.sqrt(jnp.float32(in_features))
    w = jax.random.uniform(kw, (in_features, out_features), jnp.float32,
                           minval=-bound, maxval=bound)
    b = jax.random.uniform(kb, (1, out_features), jnp.float32,
                           minval=-bound, maxval=bound)
    return w, b


if __name__ == "__main__":
    input_size, hidden1, hidden2, num_classes = 200, 128, 64, 16
    batch = 8

    key = jax.random.PRNGKey(0)
    kx, k1, k2, k3 = jax.random.split(key, 4)

    x = jax.random.normal(kx, (batch, input_size), jnp.float32)
    w1, b1 = init_linear(k1, input_size, hidden1)
    w2, b2 = init_linear(k2, hidden1, hidden2)
    w3, b3 = init_linear(k3, hidden2, num_classes)

    params = pack_params(w1, b1, w2, b2, w3, b3)   # one-time bf16 pack

    out = multi_label_classifier(x, params)
    out = jax.block_until_ready(out)

    # Pure-JAX f32 reference (module semantics). bf16 matmul operands, the
    # non-128 contracting dims, and the approx reciprocal warrant the 2e-2
    # tolerance; this also validates the compiler's zero-handling of the
    # lane-padded contracting dim.
    ref = jax.nn.sigmoid(
        jnp.maximum(jnp.maximum(x @ w1 + b1, 0.0) @ w2 + b2, 0.0) @ w3 + b3)
    assert out.shape == (batch, num_classes)
    assert jnp.allclose(out, ref, atol=2e-2, rtol=0), float(
        jnp.max(jnp.abs(out - ref)))

    print("KERNEL_OK")
</pallas_src>

<mosaic_0001>
module attributes {stable_mosaic.version = 11 : i64} {
  func.func @mlp_kernel(%arg0: i32, %arg1: memref<8x200xf32, #tpu.memory_space<vmem>>, %arg2: memref<200x128xbf16, #tpu.memory_space<vmem>>, %arg3: memref<1x128xf32, #tpu.memory_space<vmem>>, %arg4: memref<128x64xbf16, #tpu.memory_space<vmem>>, %arg5: memref<1x64xf32, #tpu.memory_space<vmem>>, %arg6: memref<64x16xbf16, #tpu.memory_space<vmem>>, %arg7: memref<1x16xf32, #tpu.memory_space<vmem>>, %arg8: memref<8x16xf32, #tpu.memory_space<vmem>>) attributes {dimension_semantics = [#tpu.dimension_semantics<parallel>], iteration_bounds = array<i64: 1>, scalar_prefetch = 0 : i64, scratch_operands = 0 : i64, tpu.core_type = #tpu.core_type<tc>, window_params = [{transform_indices = @transform_0, window_bounds = array<i64: 8, 200>}, {pipeline_mode = #tpu.pipeline_mode<synchronous>, transform_indices = @transform_1, window_bounds = array<i64: 200, 128>}, {pipeline_mode = #tpu.pipeline_mode<synchronous>, transform_indices = @transform_2, window_bounds = array<i64: 1, 128>}, {pipeline_mode = #tpu.pipeline_mode<synchronous>, transform_indices = @transform_3, window_bounds = array<i64: 128, 64>}, {pipeline_mode = #tpu.pipeline_mode<synchronous>, transform_indices = @transform_4, window_bounds = array<i64: 1, 64>}, {pipeline_mode = #tpu.pipeline_mode<synchronous>, transform_indices = @transform_5, window_bounds = array<i64: 64, 16>}, {pipeline_mode = #tpu.pipeline_mode<synchronous>, transform_indices = @transform_6, window_bounds = array<i64: 1, 16>}, {transform_indices = @transform_7, window_bounds = array<i64: 8, 16>}]} {
    %c0 = arith.constant 0 : index
    %c0_0 = arith.constant 0 : index
    %0 = vector.load %arg1[%c0, %c0_0] : memref<8x200xf32, #tpu.memory_space<vmem>>, vector<8x200xf32>
    %1 = arith.truncf %0 : vector<8x200xf32> to vector<8x200xbf16>
    %c0_1 = arith.constant 0 : index
    %c0_2 = arith.constant 0 : index
    %2 = vector.load %arg2[%c0_1, %c0_2] : memref<200x128xbf16, #tpu.memory_space<vmem>>, vector<200x128xbf16>
    %cst = arith.constant dense<0.000000e+00> : vector<8x128xf32>
    %3 = tpu.matmul %1, %2, %cst {dimension_numbers = #tpu.dot_dimension_numbers<[1], [0], [0], [1], [0, 0, 1, 1], [], []>} : vector<8x200xbf16>, vector<200x128xbf16>, vector<8x128xf32> -> vector<8x128xf32>
    %c0_3 = arith.constant 0 : index
    %c0_4 = arith.constant 0 : index
    %4 = vector.load %arg3[%c0_3, %c0_4] : memref<1x128xf32, #tpu.memory_space<vmem>>, vector<1x128xf32>
    %5 = vector.broadcast %4 : vector<1x128xf32> to vector<8x128xf32>
    %6 = arith.addf %3, %5 : vector<8x128xf32>
    %cst_5 = arith.constant 0.000000e+00 : f32
    %7 = vector.broadcast %cst_5 : f32 to vector<8x128xf32>
    %8 = arith.maximumf %6, %7 : vector<8x128xf32>
    %9 = arith.truncf %8 : vector<8x128xf32> to vector<8x128xbf16>
    %c0_6 = arith.constant 0 : index
    %c0_7 = arith.constant 0 : index
    %10 = vector.load %arg4[%c0_6, %c0_7] : memref<128x64xbf16, #tpu.memory_space<vmem>>, vector<128x64xbf16>
    %cst_8 = arith.constant dense<0.000000e+00> : vector<8x64xf32>
    %11 = tpu.matmul %9, %10, %cst_8 {dimension_numbers = #tpu.dot_dimension_numbers<[1], [0], [0], [1], [0, 0, 1, 1], [], []>} : vector<8x128xbf16>, vector<128x64xbf16>, vector<8x64xf32> -> vector<8x64xf32>
    %c0_9 = arith.constant 0 : index
    %c0_10 = arith.constant 0 : index
    %12 = vector.load %arg5[%c0_9, %c0_10] : memref<1x64xf32, #tpu.memory_space<vmem>>, vector<1x64xf32>
    %13 = vector.broadcast %12 : vector<1x64xf32> to vector<8x64xf32>
    %14 = arith.addf %11, %13 : vector<8x64xf32>
    %cst_11 = arith.constant 0.000000e+00 : f32
    %15 = vector.broadcast %cst_11 : f32 to vector<8x64xf32>
    %16 = arith.maximumf %14, %15 : vector<8x64xf32>
    %17 = arith.truncf %16 : vector<8x64xf32> to vector<8x64xbf16>
    %c0_12 = arith.constant 0 : index
    %c0_13 = arith.constant 0 : index
    %18 = vector.load %arg6[%c0_12, %c0_13] : memref<64x16xbf16, #tpu.memory_space<vmem>>, vector<64x16xbf16>
    %cst_14 = arith.constant dense<0.000000e+00> : vector<8x16xf32>
    %19 = tpu.matmul %17, %18, %cst_14 {dimension_numbers = #tpu.dot_dimension_numbers<[1], [0], [0], [1], [0, 0, 1, 1], [], []>} : vector<8x64xbf16>, vector<64x16xbf16>, vector<8x16xf32> -> vector<8x16xf32>
    %c0_15 = arith.constant 0 : index
    %c0_16 = arith.constant 0 : index
    %20 = vector.load %arg7[%c0_15, %c0_16] : memref<1x16xf32, #tpu.memory_space<vmem>>, vector<1x16xf32>
    %21 = vector.broadcast %20 : vector<1x16xf32> to vector<8x16xf32>
    %22 = arith.addf %19, %21 : vector<8x16xf32>
    %cst_17 = arith.constant 0.000000e+00 : f32
    %23 = vector.broadcast %cst_17 : f32 to vector<8x16xf32>
    %24 = arith.subf %23, %22 : vector<8x16xf32>
    %25 = math.exp %24 : vector<8x16xf32>
    %cst_18 = arith.constant 1.000000e+00 : f32
    %26 = vector.broadcast %cst_18 : f32 to vector<8x16xf32>
    %27 = arith.addf %26, %25 : vector<8x16xf32>
    %28 = tpu.reciprocal %27 {approx = true} : vector<8x16xf32> -> vector<8x16xf32>
    %c0_19 = arith.constant 0 : index
    %c0_20 = arith.constant 0 : index
    %29 = vector.load %arg8[%c0_19, %c0_20] : memref<8x16xf32, #tpu.memory_space<vmem>>, vector<8x16xf32>
    tpu.vector_store %arg8[%c0_19, %c0_20], %28 {strides = array<i32>} : memref<8x16xf32, #tpu.memory_space<vmem>>, vector<8x16xf32>,
    return
  }
  func.func @transform_0(%arg0: i32) -> (i32, i32) {
    %c0_i32 = arith.constant 0 : i32
    %c0_i32_0 = arith.constant 0 : i32
    return %arg0, %c0_i32 : i32, i32
  }
  func.func @transform_1(%arg0: i32) -> (i32, i32) {
    %c0_i32 = arith.constant 0 : i32
    %c0_i32_0 = arith.constant 0 : i32
    %c0_i32_1 = arith.constant 0 : i32
    return %c0_i32, %c0_i32_0 : i32, i32
  }
  func.func @transform_2(%arg0: i32) -> (i32, i32) {
    %c0_i32 = arith.constant 0 : i32
    %c0_i32_0 = arith.constant 0 : i32
    %c0_i32_1 = arith.constant 0 : i32
    return %c0_i32, %c0_i32_0 : i32, i32
  }
  func.func @transform_3(%arg0: i32) -> (i32, i32) {
    %c0_i32 = arith.constant 0 : i32
    %c0_i32_0 = arith.constant 0 : i32
    %c0_i32_1 = arith.constant 0 : i32
    return %c0_i32, %c0_i32_0 : i32, i32
  }
  func.func @transform_4(%arg0: i32) -> (i32, i32) {
    %c0_i32 = arith.constant 0 : i32
    %c0_i32_0 = arith.constant 0 : i32
    %c0_i32_1 = arith.constant 0 : i32
    return %c0_i32, %c0_i32_0 : i32, i32
  }
  func.func @transform_5(%arg0: i32) -> (i32, i32) {
    %c0_i32 = arith.constant 0 : i32
    %c0_i32_0 = arith.constant 0 : i32
    %c0_i32_1 = arith.constant 0 : i32
    return %c0_i32, %c0_i32_0 : i32, i32
  }
  func.func @transform_6(%arg0: i32) -> (i32, i32) {
    %c0_i32 = arith.constant 0 : i32
    %c0_i32_0 = arith.constant 0 : i32
    %c0_i32_1 = arith.constant 0 : i32
    return %c0_i32, %c0_i32_0 : i32, i32
  }
  func.func @transform_7(%arg0: i32) -> (i32, i32) {
    %c0_i32 = arith.constant 0 : i32
    %c0_i32_0 = arith.constant 0 : i32
    return %arg0, %c0_i32 : i32, i32
  }
}

</mosaic_0001>

<llo_original>
// kernel: multi_label_classifier.1
$region0: #{multi_label_classifier.1}
  #allocation0 [shape = 'u32[]', space=smem, size = 0x4, offset = 0x4, fixed_abs, tag = 'smem constant byte address 0x4 - core index']
  #allocation1 [shape = 'u32[144,128]{1,0:T(1,128)}', space=vmem, size = 0x12000, scoped, tag = 'internal scratch']
  %s0 = inlined_call_operand.hbm [shape: f32[8,200], index: 0, kind: input, shape index: {}]
  %s1 = inlined_call_operand.vmem [shape: bf16[200,128], index: 1, kind: input, shape index: {}]
  %s2 = inlined_call_operand.vmem [shape: f32[1,128], index: 2, kind: input, shape index: {}]
  %s3 = inlined_call_operand.vmem [shape: bf16[128,64], index: 3, kind: input, shape index: {}]
  %s4 = inlined_call_operand.vmem [shape: f32[1,64], index: 4, kind: input, shape index: {}]
  %s5 = inlined_call_operand.vmem [shape: bf16[64,16], index: 5, kind: input, shape index: {}]
  %s6 = inlined_call_operand.vmem [shape: f32[1,16], index: 6, kind: input, shape index: {}]
  %s7 = inlined_call_operand.hbm [shape: f32[8,16], index: 7, kind: output, shape index: {}]
  %s8 = sld [smem:[#allocation0]]
  $region42: #{multi_label_classifier.1} parent=0
    _
  %s10 = ssub.s32 1, %s8
  %s11 = scalar_select 0, %s10, %s8
  $region1: #{multi_label_classifier.1} parent=0
    #allocation2 [shape = 'u8[8192]{0}', space=vmem, size = 0x2000, scoped, tag = 'input window, operand 0, single buffered']
    #allocation3 [shape = 's32[1]{0}', space=sflag, size = 0x4, scoped, tag = 'scoped memory for multi_label_classifier.1']
    #allocation4 [shape = 's32[1]{0}', space=sflag, size = 0x4, scoped, tag = 'scoped memory for multi_label_classifier.1']
    #allocation5 [shape = 'u8[4096]{0}', space=vmem, size = 0x1000, scoped, tag = 'output window, operand 0, single buffered']
    %12 = vsyncpa [#allocation3], 0
    %13 = vsyncpa [#allocation4], 0
    // Predicated region
    $region2: #{multi_label_classifier.1} parent=1 // pred_check
      _
    $region3: #{multi_label_classifier.1} parent=1 // pred_check_branch
      %15 = sbr.rel (0) target = $region5
    $region4: #{multi_label_classifier.1} parent=1 // pred_region
      %s17 = ssub.s32 256, 256
      %18 = vsyncadd [#allocation3], %s17
      %s20 = sshll.u32 [#allocation2], 4
      %s21 = int_to_ptr.vmem [resolvable:$true] %s20
      %23 = dma.hbm_to_vmem [thread:$0]  %s0, 256, %s21, [#allocation3]
    $region5: #{multi_label_classifier.1} parent=1 // pred_fallthru
      _
    // Predicated region
    $region6: #{multi_label_classifier.1} parent=1 // pred_check
      _
    $region7: #{multi_label_classifier.1} parent=1 // pred_check_branch
      %25 = sbr.rel (0) target = $region9
    $region8: #{multi_label_classifier.1} parent=1 // pred_region
      _
    $region9: #{multi_label_classifier.1} parent=1 // pred_fallthru
      _
    // Predicated region
    $region10: #{multi_label_classifier.1} parent=1 // pred_check
      _
    $region11: #{multi_label_classifier.1} parent=1 // pred_check_branch
      %27 = sbr.rel (0) target = $region13
    $region12: #{multi_label_classifier.1} parent=1 // pred_region
      _
    $region13: #{multi_label_classifier.1} parent=1 // pred_fallthru
      _
    // Predicated region
    $region14: #{multi_label_classifier.1} parent=1 // pred_check
      _
    $region15: #{multi_label_classifier.1} parent=1 // pred_check_branch
      %29 = sbr.rel (0) target = $region17
    $region16: #{multi_label_classifier.1} parent=1 // pred_region
      _
    $region17: #{multi_label_classifier.1} parent=1 // pred_fallthru
      _
    // Predicated region
    $region18: #{multi_label_classifier.1} parent=1 // pred_check
      _
    $region19: #{multi_label_classifier.1} parent=1 // pred_check_branch
      %31 = sbr.rel (0) target = $region21
    $region20: #{multi_label_classifier.1} parent=1 // pred_region
      _
    $region21: #{multi_label_classifier.1} parent=1 // pred_fallthru
      _
    // Predicated region
    $region22: #{multi_label_classifier.1} parent=1 // pred_check
      _
    $region23: #{multi_label_classifier.1} parent=1 // pred_check_branch
      %33 = sbr.rel (0) target = $region25
    $region24: #{multi_label_classifier.1} parent=1 // pred_region
      _
    $region25: #{multi_label_classifier.1} parent=1 // pred_fallthru
      _
    // Predicated region
    $region26: #{multi_label_classifier.1} parent=1 // pred_check
      _
    $region27: #{multi_label_classifier.1} parent=1 // pred_check_branch
      %35 = sbr.rel (0) target = $region29
    $region28: #{multi_label_classifier.1} parent=1 // pred_region
      _
    $region29: #{multi_label_classifier.1} parent=1 // pred_fallthru
      _
    // Predicated region
    $region30: #{multi_label_classifier.1} parent=1 // pred_check
      _
    $region31: #{multi_label_classifier.1} parent=1 // pred_check_branch
      %37 = sbr.rel (0) target = $region33
    $region32: #{multi_label_classifier.1} parent=1 // pred_region
      %38 = dma.done [#allocation3], 256
    $region33: #{multi_label_classifier.1} parent=1 // pred_fallthru
      _
    %v40 = vld [vmem:[#allocation2] sm:$0xff]
    %v41 = vld [vmem:[#allocation2 + $0x8] sm:$0xff]
    %v42 = vpack.c.bf16 %v40, %v40
    %v43 = vpack.c.bf16 %v41, %v41
    %v44 = vld [vmem:[%s1] sm:$0xf]
    %v45 = vld [vmem:[%s1 + $0x4] sm:$0xf]
    %v46 = vld [vmem:[%s1 + $0x8] sm:$0xf]
    %v47 = vld [vmem:[%s1 + $0xc] sm:$0xf]
    %v48 = vld [vmem:[%s1 + $0x10] sm:$0xf]
    %v49 = vld [vmem:[%s1 + $0x14] sm:$0xf]
    %v50 = vld [vmem:[%s1 + $0x18] sm:$0xf]
    %v51 = vld [vmem:[%s1 + $0x1c] sm:$0xf]
    %v52 = vld [vmem:[%s1 + $0x20] sm:$0xf]
    %v53 = vld [vmem:[%s1 + $0x24] sm:$0xf]
    %v54 = vld [vmem:[%s1 + $0x28] sm:$0xf]
    %v55 = vld [vmem:[%s1 + $0x2c] sm:$0xf]
    %v56 = vld [vmem:[%s1 + $0x30] sm:$0xf]
    %v57 = vld [vmem:[%s1 + $0x34] sm:$0xf]
    %v58 = vld [vmem:[%s1 + $0x38] sm:$0xf]
    %v59 = vld [vmem:[%s1 + $0x3c] sm:$0xf]
    %v60 = vld [vmem:[%s1 + $0x40] sm:$0xf]
    %v61 = vld [vmem:[%s1 + $0x44] sm:$0xf]
    %v62 = vld [vmem:[%s1 + $0x48] sm:$0xf]
    %v63 = vld [vmem:[%s1 + $0x4c] sm:$0xf]
    %v64 = vld [vmem:[%s1 + $0x50] sm:$0xf]
    %v65 = vld [vmem:[%s1 + $0x54] sm:$0xf]
    %v66 = vld [vmem:[%s1 + $0x58] sm:$0xf]
    %v67 = vld [vmem:[%s1 + $0x5c] sm:$0xf]
    %v68 = vld [vmem:[%s1 + $0x60] sm:$0xf]
    %v69 = vld [vmem:[%s2] sm:$0x1]
    %v71 = vlaneseq
    %v72 = vshrl.u32 %v71, 7
    %v73 = vsub.s32 0, %v72
    %v74 = vrot.slane %v69, %v73
    %v101 = vunpack.c.l.b16 %v44
    %v102 = vunpack.c.l.b16 %v45
    %v103 = vunpack.c.l.b16 %v46
    %v104 = vunpack.c.l.b16 %v47
    %v105 = vunpack.c.l.b16 %v48
    %v106 = vunpack.c.l.b16 %v49
    %v107 = vunpack.c.l.b16 %v50
    %v108 = vunpack.c.l.b16 %v51
    %v109 = vunpack.c.l.b16 %v52
    %v110 = vunpack.c.l.b16 %v53
    %v111 = vunpack.c.l.b16 %v54
    %v112 = vunpack.c.l.b16 %v55
    %v113 = vunpack.c.l.b16 %v56
    %v114 = vunpack.c.l.b16 %v57
    %v115 = vunpack.c.l.b16 %v58
    %v116 = vunpack.c.l.b16 %v59
    %v117 = vunpack.c.l.b16 %v60
    %v118 = vunpack.c.l.b16 %v61
    %v119 = vunpack.c.l.b16 %v62
    %v120 = vunpack.c.l.b16 %v63
    %v121 = vunpack.c.l.b16 %v64
    %v122 = vunpack.c.l.b16 %v65
    %v123 = vunpack.c.l.b16 %v66
    %v124 = vunpack.c.l.b16 %v67
    %v125 = vunpack.c.l.b16 %v68
    %v126 = vpack.c.b16 %v102, %v101
    %v127 = vpack.c.b16 %v104, %v103
    %v128 = vpack.c.b16 %v106, %v105
    %v129 = vpack.c.b16 %v108, %v107
    %v130 = vpack.c.b16 %v110, %v109
    %v131 = vpack.c.b16 %v112, %v111
    %v132 = vpack.c.b16 %v114, %v113
    %v133 = vpack.c.b16 %v116, %v115
    %v134 = vpack.c.b16 %v118, %v117
    %v135 = vpack.c.b16 %v120, %v119
    %v136 = vpack.c.b16 %v122, %v121
    %v137 = vpack.c.b16 %v124, %v123
    %v138 = vpack.c.b16 %v125, %v125
    %vm151 = vcmask 588800
    %v153 = vsel %vm151, %v43, 0
    %vm155 = vcmask 1043456
    %v157 = vsel %vm155, %v138, 0
    %159 = vmatprep.subr.bf16.mxu0 0
    %160 = vmatpush1.bf16.msra.mxu0 %v126
    %161 = vmatprep.subr.bf16.mxu0 0
    %162 = vmatpush1.bf16.msra.mxu0 %v127
    %163 = vmatprep.subr.bf16.mxu0 0
    %164 = vmatpush1.bf16.msra.mxu0 %v128
    %165 = vmatprep.subr.bf16.mxu0 0
    %166 = vmatpush1.bf16.msra.mxu0 %v129
    %167 = vmatprep.subr.bf16.mxu0 0
    %168 = vmatpush1.bf16.msra.mxu0 %v130
    %169 = vmatprep.subr.bf16.mxu0 0
    %170 = vmatpush1.bf16.msra.mxu0 %v131
    %171 = vmatprep.subr.bf16.mxu0 0
    %172 = vmatpush1.bf16.msra.mxu0 %v132
    %173 = vmatprep.subr.bf16.mxu0 0
    %174 = vmatpush1.bf16.msra.mxu0 %v133
    %175 = vmatprep.subr.bf16.mxu0 0
    %176 = vmatpush1.bf16.msra.mxu0 %v134
    %177 = vmatprep.subr.bf16.mxu0 0
    %178 = vmatpush1.bf16.msra.mxu0 %v135
    %179 = vmatprep.subr.bf16.mxu0 0
    %180 = vmatpush1.bf16.msra.mxu0 %v136
    %181 = vmatprep.subr.bf16.mxu0 0
    %182 = vmatpush1.bf16.msra.mxu0 %v137
    %183 = vmatprep.subr.bf16.mxu0 0
    %184 = vmatpush1.bf16.msra.mxu0 %v157
    %185 = vmatprep.subr.bf16.mxu0 0
    %186 = vmatpush1.bf16.msra.mxu0 0
    %187 = vmatprep.subr.bf16.mxu0 0
    %188 = vmatpush1.bf16.msra.mxu0 0
    %189 = vmatprep.subr.bf16.mxu0 0
    %190 = vmatpush1.bf16.msra.mxu0 0
    %191 = vmatprep.mubr.bf16.mxu0 %v153
    %192 = vmatmul.mubr.bf16.gmra.mrb[0].mxu0 %v42
    %v193 = vpop.f32.mrb[0].mxu0
    %v194 = vadd.f32 %v74, %v193
    %v195 = vpop.f32.mrb[0].mxu0
    %v196 = vpop.f32.mrb[0].mxu0
    %v197 = vpop.f32.mrb[0].mxu0
    %198 = vdwg.mxu0
    %v199 = vmax.f32 %v194, 0.0
    %v200 = vpack.c.bf16 %v199, %v199
    %v201 = vld [vmem:[%s3] sm:$0xf]
    %v202 = vld [vmem:[%s3 + $0x4] sm:$0xf]
    %v203 = vld [vmem:[%s3 + $0x8] sm:$0xf]
    %v204 = vld [vmem:[%s3 + $0xc] sm:$0xf]
    %v205 = vld [vmem:[%s3 + $0x10] sm:$0xf]
    %v206 = vld [vmem:[%s3 + $0x14] sm:$0xf]
    %v207 = vld [vmem:[%s3 + $0x18] sm:$0xf]
    %v208 = vld [vmem:[%s3 + $0x1c] sm:$0xf]
    %v209 = vld [vmem:[%s3 + $0x20] sm:$0xf]
    %v210 = vld [vmem:[%s3 + $0x24] sm:$0xf]
    %v211 = vld [vmem:[%s3 + $0x28] sm:$0xf]
    %v212 = vld [vmem:[%s3 + $0x2c] sm:$0xf]
    %v213 = vld [vmem:[%s3 + $0x30] sm:$0xf]
    %v214 = vld [vmem:[%s3 + $0x34] sm:$0xf]
    %v215 = vld [vmem:[%s3 + $0x38] sm:$0xf]
    %v216 = vld [vmem:[%s3 + $0x3c] sm:$0xf]
    %v217 = vld [vmem:[%s4] sm:$0x1]
    %v219 = vlaneseq
    %v220 = vshrl.u32 %v219, 7
    %v221 = vsub.s32 0, %v220
    %v222 = vrot.slane %v217, %v221
    %v240 = vunpack.c.l.b16 %v201
    %v241 = vunpack.c.l.b16 %v202
    %v242 = vunpack.c.l.b16 %v203
    %v243 = vunpack.c.l.b16 %v204
    %v244 = vunpack.c.l.b16 %v205
    %v245 = vunpack.c.l.b16 %v206
    %v246 = vunpack.c.l.b16 %v207
    %v247 = vunpack.c.l.b16 %v208
    %v248 = vunpack.c.l.b16 %v209
    %v249 = vunpack.c.l.b16 %v210
    %v250 = vunpack.c.l.b16 %v211
    %v251 = vunpack.c.l.b16 %v212
    %v252 = vunpack.c.l.b16 %v213
    %v253 = vunpack.c.l.b16 %v214
    %v254 = vunpack.c.l.b16 %v215
    %v255 = vunpack.c.l.b16 %v216
    %v256 = vpack.c.b16 %v241, %v240
    %v257 = vpack.c.b16 %v243, %v242
    %v258 = vpack.c.b16 %v245, %v244
    %v259 = vpack.c.b16 %v247, %v246
    %v260 = vpack.c.b16 %v249, %v248
    %v261 = vpack.c.b16 %v251, %v250
    %v262 = vpack.c.b16 %v253, %v252
    %v263 = vpack.c.b16 %v255, %v254
    %272 = vmatprep.subr.bf16.mxu0 0
    %273 = vmatpush1.bf16.msra.mxu0 %v256
    %274 = vmatprep.subr.bf16.mxu0 0
    %275 = vmatpush1.bf16.msra.mxu0 %v257
    %276 = vmatprep.subr.bf16.mxu0 0
    %277 = vmatpush1.bf16.msra.mxu0 %v258
    %278 = vmatprep.subr.bf16.mxu0 0
    %279 = vmatpush1.bf16.msra.mxu0 %v259
    %280 = vmatprep.subr.bf16.mxu0 0
    %281 = vmatpush1.bf16.msra.mxu0 %v260
    %282 = vmatprep.subr.bf16.mxu0 0
    %283 = vmatpush1.bf16.msra.mxu0 %v261
    %284 = vmatprep.subr.bf16.mxu0 0
    %285 = vmatpush1.bf16.msra.mxu0 %v262
    %286 = vmatprep.subr.bf16.mxu0 0
    %287 = vmatpush1.bf16.msra.mxu0 %v263
    %288 = vmatprep.subr.bf16.mxu0 0
    %289 = vmatpush1.bf16.msra.mxu0 0
    %290 = vmatprep.subr.bf16.mxu0 0
    %291 = vmatpush1.bf16.msra.mxu0 0
    %292 = vmatprep.subr.bf16.mxu0 0
    %293 = vmatpush1.bf16.msra.mxu0 0
    %294 = vmatprep.subr.bf16.mxu0 0
    %295 = vmatpush1.bf16.msra.mxu0 0
    %296 = vmatprep.subr.bf16.mxu0 0
    %297 = vmatpush1.bf16.msra.mxu0 0
    %298 = vmatprep.subr.bf16.mxu0 0
    %299 = vmatpush1.bf16.msra.mxu0 0
    %300 = vmatprep.subr.bf16.mxu0 0
    %301 = vmatpush1.bf16.msra.mxu0 0
    %302 = vmatprep.subr.bf16.mxu0 0
    %303 = vmatpush1.bf16.msra.mxu0 0
    %304 = vmatprep.mubr.bf16.mxu0 0
    %305 = vmatmul.mubr.bf16.gmra.mrb[0].mxu0 %v200
    %v306 = vpop.f32.mrb[0].mxu0
    %v307 = vadd.f32 %v222, %v306
    %v308 = vpop.f32.mrb[0].mxu0
    %v309 = vpop.f32.mrb[0].mxu0
    %v310 = vpop.f32.mrb[0].mxu0
    %311 = vdwg.mxu0
    %v312 = vmax.f32 %v307, 0.0
    %v313 = vpack.c.bf16 %v312, %v312
    %v314 = vld [vmem:[%s5] sm:$0xf]
    %v315 = vld [vmem:[%s5 + $0x4] sm:$0xf]
    %v316 = vld [vmem:[%s5 + $0x8] sm:$0xf]
    %v317 = vld [vmem:[%s5 + $0xc] sm:$0xf]
    %v318 = vld [vmem:[%s5 + $0x10] sm:$0xf]
    %v319 = vld [vmem:[%s5 + $0x14] sm:$0xf]
    %v320 = vld [vmem:[%s5 + $0x18] sm:$0xf]
    %v321 = vld [vmem:[%s5 + $0x1c] sm:$0xf]
    %v322 = vld [vmem:[%s6] sm:$0x1]
    %v324 = vlaneseq
    %v325 = vshrl.u32 %v324, 7
    %v326 = vsub.s32 0, %v325
    %v327 = vrot.slane %v322, %v326
    %v337 = vunpack.c.l.b16 %v314
    %v338 = vunpack.c.l.b16 %v315
    %v339 = vunpack.c.l.b16 %v316
    %v340 = vunpack.c.l.b16 %v317
    %v341 = vunpack.c.l.b16 %v318
    %v342 = vunpack.c.l.b16 %v319
    %v343 = vunpack.c.l.b16 %v320
    %v344 = vunpack.c.l.b16 %v321
    %v345 = vpack.c.b16 %v338, %v337
    %v346 = vpack.c.b16 %v340, %v339
    %v347 = vpack.c.b16 %v342, %v341
    %v348 = vpack.c.b16 %v344, %v343
    %vm353 = vcmask 523264
    %v355 = vsel %vm353, %v313, 0
    %357 = vmatprep.subr.bf16.mxu0 0
    %358 = vmatpush1.bf16.msra.mxu0 %v345
    %359 = vmatprep.subr.bf16.mxu0 0
    %360 = vmatpush1.bf16.msra.mxu0 %v346
    %361 = vmatprep.subr.bf16.mxu0 0
    %362 = vmatpush1.bf16.msra.mxu0 %v347
    %363 = vmatprep.subr.bf16.mxu0 0
    %364 = vmatpush1.bf16.msra.mxu0 %v348
    %365 = vmatprep.subr.bf16.mxu0 0
    %366 = vmatpush1.bf16.msra.mxu0 0
    %367 = vmatprep.subr.bf16.mxu0 0
    %368 = vmatpush1.bf16.msra.mxu0 0
    %369 = vmatprep.subr.bf16.mxu0 0
    %370 = vmatpush1.bf16.msra.mxu0 0
    %371 = vmatprep.subr.bf16.mxu0 0
    %372 = vmatpush1.bf16.msra.mxu0 0
    %373 = vmatprep.subr.bf16.mxu0 0
    %374 = vmatpush1.bf16.msra.mxu0 0
    %375 = vmatprep.subr.bf16.mxu0 0
    %376 = vmatpush1.bf16.msra.mxu0 0
    %377 = vmatprep.subr.bf16.mxu0 0
    %378 = vmatpush1.bf16.msra.mxu0 0
    %379 = vmatprep.subr.bf16.mxu0 0
    %380 = vmatpush1.bf16.msra.mxu0 0
    %381 = vmatprep.subr.bf16.mxu0 0
    %382 = vmatpush1.bf16.msra.mxu0 0
    %383 = vmatprep.subr.bf16.mxu0 0
    %384 = vmatpush1.bf16.msra.mxu0 0
    %385 = vmatprep.subr.bf16.mxu0 0
    %386 = vmatpush1.bf16.msra.mxu0 0
    %387 = vmatprep.subr.bf16.mxu0 0
    %388 = vmatpush1.bf16.msra.mxu0 0
    %389 = vmatprep.mubr.bf16.mxu0 0
    %390 = vmatmul.mubr.bf16.gmra.mrb[0].mxu0 %v355
    %v391 = vpop.f32.mrb[0].mxu0
    %v392 = vadd.f32 %v327, %v391
    %v393 = vpop.f32.mrb[0].mxu0
    %v394 = vpop.f32.mrb[0].mxu0
    %v395 = vpop.f32.mrb[0].mxu0
    %396 = vdwg.mxu0
    %v397 = vsub.f32 0.0, %v392
    %v398 = vmul.f32 %v397, 1.442695
    %v399 = vpow.pop %v398
    %v400 = vadd.f32 %v399, 1.0
    %v401 = vrcp.pop %v400
    %vm402 = vcmask 130048
    %403 = vst.msk [vmem:[#allocation5] sm:$0xff] %vm402, %v401
    // Predicated region
    $region34: #{multi_label_classifier.1} parent=1 // pred_check
      _
    $region35: #{multi_label_classifier.1} parent=1 // pred_check_branch
      %405 = sbr.rel (0) target = $region37
    $region36: #{multi_label_classifier.1} parent=1 // pred_region
      %s407 = ssub.s32 128, 128
      %408 = vsyncadd [#allocation4], %s407
      %s410 = sshll.u32 [#allocation5], 4
      %s411 = int_to_ptr.vmem [resolvable:$true] %s410
      %413 = dma.vmem_to_hbm [thread:$0]  %s411, 128, %s7, [#allocation4]
    $region37: #{multi_label_classifier.1} parent=1 // pred_fallthru
      _
    // Predicated region
    $region38: #{multi_label_classifier.1} parent=1 // pred_check
      _
    $region39: #{multi_label_classifier.1} parent=1 // pred_check_branch
      %415 = sbr.rel (0) target = $region41
    $region40: #{multi_label_classifier.1} parent=1 // pred_region
      %416 = dma.done [#allocation4], 128
    $region41: #{multi_label_classifier.1} parent=1 // pred_fallthru
      _
    %417 = vsyncpa [#allocation3], 1
    %418 = vsyncpa [#allocation4], 1

</llo_original>
